<compile_context>
chip_gen: v7x
topology: tpu7x:2x2x1
jax: 0.10.0
libtpu: 0.0.40
codegen_flags: <defaults>
</compile_context>

<pallas_src>
import functools

import jax
import jax.numpy as jnp
from jax.experimental import pallas as pl
from jax.experimental.pallas import tpu as pltpu


def _layer_stack_kernel(x_ref, w1_ref, b1_ref, w2_ref, gb_ref, o_ref, xn_ref,
                        *, gelu_bf16):
    """One grid step == (token tile, layer, hidden chunk).

    o_ref carries the activation; xn_ref caches the LayerNorm output (bf16)
    for reuse across the hidden chunks of the current layer.
    gb_ref rows: 0 = gamma, 1 = beta, 2 = b2 (all f32, shape (3, E)).
    """
    l = pl.program_id(1)
    c = pl.program_id(2)
    n_c = pl.num_programs(2)

    @pl.when(jnp.logical_and(l == 0, c == 0))
    def _():
        o_ref[...] = x_ref[...]

    # --- pre-LayerNorm (one pass: mean & mean(x^2)), once per layer ---
    @pl.when(c == 0)
    def _():
        x = o_ref[...].astype(jnp.float32)
        mean = jnp.mean(x, axis=-1, keepdims=True)
        msq = jnp.mean(x * x, axis=-1, keepdims=True)
        var = jnp.maximum(msq - mean * mean, 0.0)
        xn = (x - mean) * jax.lax.rsqrt(var + 1e-5)
        xn = xn * gb_ref[0:1, :] + gb_ref[1:2, :]
        xn_ref[...] = xn.astype(jnp.bfloat16)      # MXU operand in bf16

    # --- MLP chunk: Linear -> GELU -> Linear, accumulated into the carry ---
    # TODO(synk): PyTorch nn.GELU defaults to the exact erf form; the tanh
    # approximation is used here (matching the in-file JAX reference).
    h1 = jnp.dot(xn_ref[...], w1_ref[...], preferred_element_type=jnp.float32)
    if gelu_bf16:
        # v6e/v7x: bf16-native VPU/EUP -> halve the element count of the
        # (TN, h_chunk) intermediate.  It is cast to bf16 for the 2nd matmul
        # anyway.
        h1 = h1.astype(jnp.bfloat16) + b1_ref[...].astype(jnp.bfloat16)
        h1 = jax.nn.gelu(h1, approximate=True)
    else:
        # v5e has no bf16 VALU/EUP: keep the GELU in f32 there.
        h1 = h1 + b1_ref[...]
        h1 = jax.nn.gelu(h1, approximate=True).astype(jnp.bfloat16)

    part = jnp.dot(h1, w2_ref[...], preferred_element_type=jnp.float32)
    # Add the output bias exactly once (on the last hidden chunk).
    part = part + jnp.where(c == n_c - 1, gb_ref[2:3, :], 0.0)

    # residual accumulate in f32; the carry lives in o_ref (f32).
    o_ref[...] = (o_ref[...].astype(jnp.float32) + part).astype(o_ref.dtype)


def _device_kind():
    try:
        return jax.devices()[0].device_kind.lower()
    except Exception:
        return ""


def _tpu_vmem_bytes():
    try:
        return int(pltpu.get_tpu_info().vmem_capacity_bytes)
    except Exception:
        return 128 << 20  # assume v5e/v6e-class if the query is unavailable


def _choose_token_tile(n_tokens, cap):
    if n_tokens <= 512:
        return n_tokens
    if n_tokens <= cap:
        # Split into (at least) two tiles so the 'parallel' token axis can
        # actually feed both v7x TensorCores; round up to 8 sublanes.
        tn = -(-n_tokens // 2)
        return -(-tn // 8) * 8
    return cap


def _choose_hidden_chunk(hidden):
    # Weight residency is bounded by chunking H on the grid; full H when small.
    if hidden <= 2048:
        return hidden
    for hc in (2048, 1024, 512, 256, 128):
        if hidden % hc == 0:
            return hc
    return hidden  # awkward H: keep full-width weights resident


def _vmem_estimate(tn, e, hc):
    act = 2 * 2 * tn * e * 4                  # x + carry/out tiles, double-buffered
    wts = 2 * 2 * 2 * e * hc                  # W1 + W2 chunks (bf16), double-buffered
    small = 2 * 8 * (hc + 3 * e) * 4          # b1 + packed (gamma|beta|b2), sublane-padded
    scratch = tn * e * 2                      # bf16 LayerNorm-output scratch
    temps = 4 * tn * e * 4 + tn * hc * 6      # f32 temporaries + GELU intermediate
    return act + wts + small + scratch + temps


def layer_stack_forward(x, params, *, half_layers=False):
    """x: (S, B, E) float32.  params: dict of per-layer stacked weights."""
    S, B, E = x.shape
    L, _, H = params["w1"].shape
    n_layers = (L // 2) if half_layers else L  # default (no layer dropout): L
    # TODO(synk): the torch.randint layer-dropout path (min_num_layers < L) is
    # a host-side RNG choice of n_layers; with the default config it is always
    # L, which is what we implement.

    N = S * B
    x2 = x.reshape(N, E).astype(jnp.float32)

    vmem_phys = _tpu_vmem_bytes()
    vmem_cap = (vmem_phys * 3) // 4           # headroom for Pallas-internal scratch
    gelu_bf16 = "v5" not in _device_kind()    # f32 GELU on v5e only

    tn_cap = 1024 if vmem_phys <= (64 << 20) else 2048   # v7x vs v5e/v6e
    TN = _choose_token_tile(N, tn_cap)
    h_chunk = _choose_hidden_chunk(H)
    while TN > 64 and (_vmem_estimate(TN, E, h_chunk) * 3) // 2 > vmem_cap:
        TN = max(64, (-(-(TN // 2) // 8)) * 8)

    n_token_tiles = pl.cdiv(N, TN)
    n_h_chunks = pl.cdiv(H, h_chunk)          # h_chunk divides H by construction

    cp_kwargs = dict(dimension_semantics=("parallel", "arbitrary", "arbitrary"))
    budget = (_vmem_estimate(TN, E, h_chunk) * 3) // 2
    if budget > (32 << 20):
        cp_kwargs["vmem_limit_bytes"] = int(min(budget, vmem_cap))

    kernel = functools.partial(_layer_stack_kernel, gelu_bf16=gelu_bf16)

    out = pl.pallas_call(
        kernel,
        out_shape=jax.ShapeDtypeStruct((N, E), jnp.float32),
        grid_spec=pltpu.PrefetchScalarGridSpec(
            num_scalar_prefetch=0,
            grid=(n_token_tiles, n_layers, n_h_chunks),
            in_specs=[
                pl.BlockSpec((TN, E), lambda t, l, c: (t, 0)),                       # x
                pl.BlockSpec((pl.Squeezed(), E, h_chunk), lambda t, l, c: (l, 0, c)),  # W1
                pl.BlockSpec((pl.Squeezed(), 1, h_chunk), lambda t, l, c: (l, 0, c)),  # b1
                pl.BlockSpec((pl.Squeezed(), h_chunk, E), lambda t, l, c: (l, c, 0)),  # W2
                pl.BlockSpec((pl.Squeezed(), 3, E), lambda t, l, c: (l, 0, 0)),        # gamma/beta/b2
            ],
            out_specs=pl.BlockSpec((TN, E), lambda t, l, c: (t, 0)),
            scratch_shapes=[pltpu.VMEM((TN, E), jnp.bfloat16)],
        ),
        compiler_params=pltpu.CompilerParams(**cp_kwargs),
    )(x2, params["w1"], params["b1"], params["w2"], params["gb"])

    return out.reshape(S, B, E).astype(x.dtype)


def _reference_forward(x, params, n_layers, gelu_bf16):
    """Pure-JAX reference with identical arithmetic (bf16 matmul operands)."""
    S, B, E = x.shape
    h = x.reshape(S * B, E).astype(jnp.float32)
    gb = params["gb"]
    for l in range(n_layers):
        mean = jnp.mean(h, axis=-1, keepdims=True)
        var = jnp.maximum(jnp.mean(h * h, axis=-1, keepdims=True) - mean * mean, 0.0)
        xn = (h - mean) * jax.lax.rsqrt(var + 1e-5)
        xn = xn * gb[l, 0] + gb[l, 1]
        h1 = jnp.dot(xn.astype(jnp.bfloat16), params["w1"][l],
                     preferred_element_type=jnp.float32)
        if gelu_bf16:
            h1 = h1.astype(jnp.bfloat16) + params["b1"][l, 0].astype(jnp.bfloat16)
            h1 = jax.nn.gelu(h1, approximate=True)
        else:
            h1 = h1 + params["b1"][l, 0]
            h1 = jax.nn.gelu(h1, approximate=True).astype(jnp.bfloat16)
        h2 = jnp.dot(h1, params["w2"][l], preferred_element_type=jnp.float32) + gb[l, 2]
        h = h + h2
    return h.reshape(S, B, E).astype(x.dtype)


def make_params(key, num_layers, emsize, hidden):
    """Deterministic param init (PyTorch-Linear-like uniform bounds).

    Weights are stored in bf16 (MXU-native); biases / LN params stay f32.
    gamma, beta, b2 are packed into one (L, 3, E) tensor.
    """
    ks = jax.random.split(key, 4 * num_layers)
    w1, b1, w2, gb = [], [], [], []
    for l in range(num_layers):
        k0, k1, k2, k3 = ks[4 * l: 4 * l + 4]
        lim1 = 1.0 / (emsize ** 0.5)
        lim2 = 1.0 / (hidden ** 0.5)
        w1.append(jax.random.uniform(k0, (emsize, hidden), jnp.float32, -lim1, lim1))
        b1.append(jax.random.uniform(k1, (1, hidden), jnp.float32, -lim1, lim1))
        w2.append(jax.random.uniform(k2, (hidden, emsize), jnp.float32, -lim2, lim2))
        b2 = jax.random.uniform(k3, (emsize,), jnp.float32, -lim2, lim2)
        gamma = jnp.ones((emsize,), jnp.float32)
        beta = jnp.zeros((emsize,), jnp.float32)
        gb.append(jnp.stack([gamma, beta, b2], axis=0))
    return {
        "w1": jnp.stack(w1).astype(jnp.bfloat16),
        "b1": jnp.stack(b1),
        "w2": jnp.stack(w2).astype(jnp.bfloat16),
        "gb": jnp.stack(gb),
    }


if __name__ == "__main__":
    # Small but lane-dense config: E multiple of 128 keeps stores unmasked and
    # the MXU contraction dim full.
    SEQ, BATCH, EMSIZE, HIDDEN, NUM_LAYERS = 8, 2, 128, 256, 4

    key = jax.random.PRNGKey(0)
    kx, kp = jax.random.split(key)
    x = jax.random.normal(kx, (SEQ, BATCH, EMSIZE), jnp.float32)
    params = make_params(kp, NUM_LAYERS, EMSIZE, HIDDEN)

    out = layer_stack_forward(x, params)
    out = jax.block_until_ready(out)

    gelu_bf16 = "v5" not in _device_kind()
    ref = _reference_forward(x, params, NUM_LAYERS, gelu_bf16)
    assert out.shape == (SEQ, BATCH, EMSIZE)
    assert jnp.allclose(out, ref, atol=1e-2, rtol=1e-2), "mismatch vs JAX reference"

    print("KERNEL_OK")
</pallas_src>

<mosaic_0001>
module attributes {stable_mosaic.version = 11 : i64} {
  func.func @_layer_stack_kernel(%arg0: i32, %arg1: i32, %arg2: i32, %arg3: memref<16x128xf32, #tpu.memory_space<vmem>>, %arg4: memref<1x128x256xbf16, #tpu.memory_space<vmem>>, %arg5: memref<1x1x256xf32, #tpu.memory_space<vmem>>, %arg6: memref<1x256x128xbf16, #tpu.memory_space<vmem>>, %arg7: memref<1x3x128xf32, #tpu.memory_space<vmem>>, %arg8: memref<16x128xf32, #tpu.memory_space<vmem>>, %arg9: memref<16x128xbf16, #tpu.memory_space<vmem>>) attributes {dimension_semantics = [#tpu.dimension_semantics<parallel>, #tpu.dimension_semantics<arbitrary>, #tpu.dimension_semantics<arbitrary>], iteration_bounds = array<i64: 1, 4, 1>, scalar_prefetch = 0 : i64, scratch_operands = 1 : i64, tpu.core_type = #tpu.core_type<tc>, window_params = [{transform_indices = @transform_0, window_bounds = array<i64: 16, 128>}, {transform_indices = @transform_1, window_bounds = array<i64: 1, 128, 256>}, {transform_indices = @transform_2, window_bounds = array<i64: 1, 1, 256>}, {transform_indices = @transform_3, window_bounds = array<i64: 1, 256, 128>}, {transform_indices = @transform_4, window_bounds = array<i64: 1, 3, 128>}, {transform_indices = @transform_5, window_bounds = array<i64: 16, 128>}]} {
    %c0_i32 = arith.constant 0 : i32
    %0 = arith.cmpi eq, %arg1, %c0_i32 : i32
    %c0_i32_0 = arith.constant 0 : i32
    %1 = arith.cmpi eq, %arg2, %c0_i32_0 : i32
    %2 = arith.andi %0, %1 : i1
    %3 = arith.extui %2 : i1 to i32
    %c0_i32_1 = arith.constant 0 : i32
    %4 = arith.cmpi ne, %3, %c0_i32_1 : i32
    scf.if %4 {
      %c0_27 = arith.constant 0 : index
      %c0_28 = arith.constant 0 : index
      %44 = vector.load %arg3[%c0_27, %c0_28] : memref<16x128xf32, #tpu.memory_space<vmem>>, vector<16x128xf32>
      %c0_29 = arith.constant 0 : index
      %c0_30 = arith.constant 0 : index
      %45 = vector.load %arg8[%c0_29, %c0_30] : memref<16x128xf32, #tpu.memory_space<vmem>>, vector<16x128xf32>
      tpu.vector_store %arg8[%c0_29, %c0_30], %44 {strides = array<i32>} : memref<16x128xf32, #tpu.memory_space<vmem>>, vector<16x128xf32>,
    } else {
    }
    %c0_i32_2 = arith.constant 0 : i32
    %5 = arith.cmpi eq, %arg2, %c0_i32_2 : i32
    %6 = arith.extui %5 : i1 to i32
    %c0_i32_3 = arith.constant 0 : i32
    %7 = arith.cmpi ne, %6, %c0_i32_3 : i32
    scf.if %7 {
      %c0_27 = arith.constant 0 : index
      %c0_28 = arith.constant 0 : index
      %44 = vector.load %arg8[%c0_27, %c0_28] : memref<16x128xf32, #tpu.memory_space<vmem>>, vector<16x128xf32>
      %cst_29 = arith.constant dense<0.000000e+00> : vector<16xf32>
      %45 = vector.multi_reduction <add>, %44, %cst_29 [1] : vector<16x128xf32> to vector<16xf32>
      %46 = vector.shape_cast %45 : vector<16xf32> to vector<16x1xf32>
      %cst_30 = arith.constant 1.280000e+02 : f32
      %47 = vector.broadcast %cst_30 : f32 to vector<16x1xf32>
      %48 = arith.divf %46, %47 : vector<16x1xf32>
      %49 = arith.mulf %44, %44 : vector<16x128xf32>
      %cst_31 = arith.constant dense<0.000000e+00> : vector<16xf32>
      %50 = vector.multi_reduction <add>, %49, %cst_31 [1] : vector<16x128xf32> to vector<16xf32>
      %51 = vector.shape_cast %50 : vector<16xf32> to vector<16x1xf32>
      %cst_32 = arith.constant 1.280000e+02 : f32
      %52 = vector.broadcast %cst_32 : f32 to vector<16x1xf32>
      %53 = arith.divf %51, %52 : vector<16x1xf32>
      %54 = arith.mulf %48, %48 : vector<16x1xf32>
      %55 = arith.subf %53, %54 : vector<16x1xf32>
      %cst_33 = arith.constant 0.000000e+00 : f32
      %56 = vector.broadcast %cst_33 : f32 to vector<16x1xf32>
      %57 = arith.maximumf %55, %56 : vector<16x1xf32>
      %58 = vector.broadcast %48 : vector<16x1xf32> to vector<16x128xf32>
      %59 = arith.subf %44, %58 : vector<16x128xf32>
      %cst_34 = arith.constant 9.99999974E-6 : f32
      %60 = vector.broadcast %cst_34 : f32 to vector<16x1xf32>
      %61 = arith.addf %57, %60 : vector<16x1xf32>
      %62 = math.rsqrt %61 : vector<16x1xf32>
      %63 = vector.broadcast %62 : vector<16x1xf32> to vector<16x128xf32>
      %64 = arith.mulf %59, %63 : vector<16x128xf32>
      %c0_35 = arith.constant 0 : index
      %c0_36 = arith.constant 0 : index
      %c0_37 = arith.constant 0 : index
      %65 = vector.load %arg7[%c0_35, %c0_36, %c0_37] : memref<1x3x128xf32, #tpu.memory_space<vmem>>, vector<1x1x128xf32>
      %66 = vector.shape_cast %65 : vector<1x1x128xf32> to vector<1x128xf32>
      %67 = vector.broadcast %66 : vector<1x128xf32> to vector<16x128xf32>
      %68 = arith.mulf %64, %67 : vector<16x128xf32>
      %c0_38 = arith.constant 0 : index
      %c1 = arith.constant 1 : index
      %c0_39 = arith.constant 0 : index
      %69 = vector.load %arg7[%c0_38, %c1, %c0_39] : memref<1x3x128xf32, #tpu.memory_space<vmem>>, vector<1x1x128xf32>
      %70 = vector.shape_cast %69 : vector<1x1x128xf32> to vector<1x128xf32>
      %71 = vector.broadcast %70 : vector<1x128xf32> to vector<16x128xf32>
      %72 = arith.addf %68, %71 : vector<16x128xf32>
      %73 = arith.truncf %72 : vector<16x128xf32> to vector<16x128xbf16>
      %c0_40 = arith.constant 0 : index
      %c0_41 = arith.constant 0 : index
      %74 = vector.load %arg9[%c0_40, %c0_41] : memref<16x128xbf16, #tpu.memory_space<vmem>>, vector<16x128xbf16>
      tpu.vector_store %arg9[%c0_40, %c0_41], %73 {strides = array<i32>} : memref<16x128xbf16, #tpu.memory_space<vmem>>, vector<16x128xbf16>,
    } else {
    }
    %c0 = arith.constant 0 : index
    %c0_4 = arith.constant 0 : index
    %8 = vector.load %arg9[%c0, %c0_4] : memref<16x128xbf16, #tpu.memory_space<vmem>>, vector<16x128xbf16>
    %c0_5 = arith.constant 0 : index
    %c0_6 = arith.constant 0 : index
    %c0_7 = arith.constant 0 : index
    %9 = vector.load %arg4[%c0_5, %c0_6, %c0_7] : memref<1x128x256xbf16, #tpu.memory_space<vmem>>, vector<1x128x256xbf16>
    %10 = vector.shape_cast %9 : vector<1x128x256xbf16> to vector<128x256xbf16>
    %cst = arith.constant dense<0.000000e+00> : vector<16x256xf32>
    %11 = tpu.matmul %8, %10, %cst {dimension_numbers = #tpu.dot_dimension_numbers<[1], [0], [0], [1], [0, 0, 1, 1], [], []>} : vector<16x128xbf16>, vector<128x256xbf16>, vector<16x256xf32> -> vector<16x256xf32>
    %12 = arith.truncf %11 : vector<16x256xf32> to vector<16x256xbf16>
    %c0_8 = arith.constant 0 : index
    %c0_9 = arith.constant 0 : index
    %c0_10 = arith.constant 0 : index
    %13 = vector.load %arg5[%c0_8, %c0_9, %c0_10] : memref<1x1x256xf32, #tpu.memory_space<vmem>>, vector<1x1x256xf32>
    %14 = vector.shape_cast %13 : vector<1x1x256xf32> to vector<1x256xf32>
    %15 = arith.truncf %14 : vector<1x256xf32> to vector<1x256xbf16>
    %16 = vector.broadcast %15 : vector<1x256xbf16> to vector<16x256xbf16>
    %17 = arith.addf %12, %16 : vector<16x256xbf16>
    %18 = arith.mulf %17, %17 : vector<16x256xbf16>
    %19 = arith.mulf %17, %18 : vector<16x256xbf16>
    %cst_11 = arith.constant 4.467770e-02 : bf16
    %20 = vector.broadcast %cst_11 : bf16 to vector<16x256xbf16>
    %21 = arith.mulf %20, %19 : vector<16x256xbf16>
    %22 = arith.addf %17, %21 : vector<16x256xbf16>
    %cst_12 = arith.constant 7.968750e-01 : bf16
    %23 = vector.broadcast %cst_12 : bf16 to vector<16x256xbf16>
    %24 = arith.mulf %23, %22 : vector<16x256xbf16>
    %25 = math.tanh %24 : vector<16x256xbf16>
    %cst_13 = arith.constant 1.000000e+00 : bf16
    %26 = vector.broadcast %cst_13 : bf16 to vector<16x256xbf16>
    %27 = arith.addf %26, %25 : vector<16x256xbf16>
    %cst_14 = arith.constant 5.000000e-01 : bf16
    %28 = vector.broadcast %cst_14 : bf16 to vector<16x256xbf16>
    %29 = arith.mulf %28, %27 : vector<16x256xbf16>
    %30 = arith.mulf %17, %29 : vector<16x256xbf16>
    %c0_15 = arith.constant 0 : index
    %c0_16 = arith.constant 0 : index
    %c0_17 = arith.constant 0 : index
    %31 = vector.load %arg6[%c0_15, %c0_16, %c0_17] : memref<1x256x128xbf16, #tpu.memory_space<vmem>>, vector<1x256x128xbf16>
    %32 = vector.shape_cast %31 : vector<1x256x128xbf16> to vector<256x128xbf16>
    %cst_18 = arith.constant dense<0.000000e+00> : vector<16x128xf32>
    %33 = tpu.matmul %30, %32, %cst_18 {dimension_numbers = #tpu.dot_dimension_numbers<[1], [0], [0], [1], [0, 0, 1, 1], [], []>} : vector<16x256xbf16>, vector<256x128xbf16>, vector<16x128xf32> -> vector<16x128xf32>
    %c0_i32_19 = arith.constant 0 : i32
    %34 = arith.cmpi eq, %arg2, %c0_i32_19 : i32
    %c0_20 = arith.constant 0 : index
    %c2 = arith.constant 2 : index
    %c0_21 = arith.constant 0 : index
    %35 = vector.load %arg7[%c0_20, %c2, %c0_21] : memref<1x3x128xf32, #tpu.memory_space<vmem>>, vector<1x1x128xf32>
    %36 = vector.shape_cast %35 : vector<1x1x128xf32> to vector<1x128xf32>
    %cst_22 = arith.constant 0.000000e+00 : f32
    %37 = vector.broadcast %cst_22 : f32 to vector<1x128xf32>
    %38 = arith.select %34, %36, %37 : vector<1x128xf32>
    %39 = vector.broadcast %38 : vector<1x128xf32> to vector<16x128xf32>
    %40 = arith.addf %33, %39 : vector<16x128xf32>
    %c0_23 = arith.constant 0 : index
    %c0_24 = arith.constant 0 : index
    %41 = vector.load %arg8[%c0_23, %c0_24] : memref<16x128xf32, #tpu.memory_space<vmem>>, vector<16x128xf32>
    %42 = arith.addf %41, %40 : vector<16x128xf32>
    %c0_25 = arith.constant 0 : index
    %c0_26 = arith.constant 0 : index
    %43 = vector.load %arg8[%c0_25, %c0_26] : memref<16x128xf32, #tpu.memory_space<vmem>>, vector<16x128xf32>
    tpu.vector_store %arg8[%c0_25, %c0_26], %42 {strides = array<i32>} : memref<16x128xf32, #tpu.memory_space<vmem>>, vector<16x128xf32>,
    return
  }
  func.func @transform_0(%arg0: i32, %arg1: i32, %arg2: i32) -> (i32, i32) {
    %c0_i32 = arith.constant 0 : i32
    %c0_i32_0 = arith.constant 0 : i32
    return %arg0, %c0_i32 : i32, i32
  }
  func.func @transform_1(%arg0: i32, %arg1: i32, %arg2: i32) -> (i32, i32, i32) {
    %c0_i32 = arith.constant 0 : i32
    %c0_i32_0 = arith.constant 0 : i32
    return %arg1, %c0_i32, %arg2 : i32, i32, i32
  }
  func.func @transform_2(%arg0: i32, %arg1: i32, %arg2: i32) -> (i32, i32, i32) {
    %c0_i32 = arith.constant 0 : i32
    %c0_i32_0 = arith.constant 0 : i32
    return %arg1, %c0_i32, %arg2 : i32, i32, i32
  }
  func.func @transform_3(%arg0: i32, %arg1: i32, %arg2: i32) -> (i32, i32, i32) {
    %c0_i32 = arith.constant 0 : i32
    %c0_i32_0 = arith.constant 0 : i32
    return %arg1, %arg2, %c0_i32 : i32, i32, i32
  }
  func.func @transform_4(%arg0: i32, %arg1: i32, %arg2: i32) -> (i32, i32, i32) {
    %c0_i32 = arith.constant 0 : i32
    %c0_i32_0 = arith.constant 0 : i32
    %c0_i32_1 = arith.constant 0 : i32
    return %arg1, %c0_i32, %c0_i32_0 : i32, i32, i32
  }
  func.func @transform_5(%arg0: i32, %arg1: i32, %arg2: i32) -> (i32, i32) {
    %c0_i32 = arith.constant 0 : i32
    %c0_i32_0 = arith.constant 0 : i32
    return %arg0, %c0_i32 : i32, i32
  }
}

</mosaic_0001>

<llo_original>
// kernel: tpu_custom_call.1
$region0: #{tpu_custom_call.1}
  #allocation0 [shape = 'u32[]', space=smem, size = 0x4, offset = 0x4, fixed_abs, tag = 'smem constant byte address 0x4 - core index']
  #allocation1 [shape = 'u32[144,128]{1,0:T(1,128)}', space=vmem, size = 0x12000, scoped, tag = 'internal scratch']
  #allocation2 [shape = 'bf16[16,128]{1,0:T(16,128)(2,1)}', space=vmem, size = 0x1000, scoped, tag = 'scratch operand']
  %s0 = inlined_call_operand.vmem [shape: f32[16,128], index: 0, kind: input, shape index: {}]
  %s1 = inlined_call_operand.hbm [shape: bf16[4,128,256], index: 1, kind: input, shape index: {}]
  %s2 = inlined_call_operand.vmem [shape: f32[4,1,256], index: 2, kind: input, shape index: {}]
  %s3 = inlined_call_operand.hbm [shape: bf16[4,256,128], index: 3, kind: input, shape index: {}]
  %s4 = inlined_call_operand.vmem [shape: f32[4,3,128], index: 4, kind: input, shape index: {}]
  %s5 = inlined_call_operand.hbm [shape: f32[16,128], index: 5, kind: output, shape index: {}]
  %s6 = sld [smem:[#allocation0]]
  $region69: #{tpu_custom_call.1} parent=0
    _
  %s8 = ssub.s32 1, %s6
  %s9 = scalar_select 0, %s8, %s6
  $region1: #{tpu_custom_call.1} parent=0
    #allocation3 [shape = 'u8[131072]{0}', space=vmem, size = 0x20000, scoped, tag = 'input window, operand 1']
    #allocation4 [shape = 's32[2]{0}', space=sflag, size = 0x8, scoped, tag = 'scoped memory for tpu_custom_call.1']
    #allocation5 [shape = 's32[2]{0}', space=sflag, size = 0x8, scoped, tag = 'scoped memory for tpu_custom_call.1']
    #allocation6 [shape = 'u8[131072]{0}', space=vmem, size = 0x20000, scoped, tag = 'input window, operand 3']
    #allocation7 [shape = 's32[2]{0}', space=sflag, size = 0x8, scoped, tag = 'scoped memory for tpu_custom_call.1']
    #allocation8 [shape = 'u8[8192]{0}', space=vmem, size = 0x2000, scoped, tag = 'output window, operand 0, single buffered']
    %10 = vsyncpa [#allocation4], 0
    %s11 = scalar_lea.sflag [#allocation4], 1
    %12 = vsyncpa %s11, 0
    %13 = vsyncpa [#allocation7], 0
    %s14 = scalar_lea.sflag [#allocation7], 1
    %15 = vsyncpa %s14, 0
    %16 = vsyncpa [#allocation5], 0
    loop: start=0, step=1, limit=6
    $region2: #{tpu_custom_call.1} parent=1 // loop_pre_header
      _
    $region3: #{tpu_custom_call.1} parent=1 // loop_header
      %s18 = sphi 0, %s22
      %p19 = scmp.ge.s32.totalorder %s18, 6
      %s25 = sphi 0, %s44
      %s26 = sphi 0, %s40
      %s27 = sphi 0, %s36
      %s28 = sphi 0, %s25
      %s29 = sphi 0, %s26
      %s30 = sphi 0, %s27
      %s31 = sphi 0, %s28
      %s32 = sphi 0, %s29
      %s33 = sphi 0, %s30
      %s47 = sphi 0, %s49
      %s50 = sphi 0, %s47
      %s51 = sphi 0, %s50
      %s67 = sphi 0, %s51
      %s75 = sphi 0, %s77
      %s78 = sphi 0, %s75
      %s79 = sphi 0, %s78
      %s95 = sphi 0, %s79
      %s103 = sphi 0, %s105
      %s106 = sphi 0, %s103
      %s107 = sphi 0, %s106
      %s123 = sphi 0, %s107
      %s131 = sphi 0, %s133
      %s134 = sphi 0, %s131
      %s135 = sphi 0, %s134
      %s151 = sphi 0, %s135
      %s157 = sphi 0, %s159
      %s160 = sphi 0, %s157
      %s161 = sphi 0, %s160
      %s177 = sphi 0, %s161
      %s183 = sphi 0, %s185
      %s186 = sphi 0, %s183
      %s187 = sphi 0, %s186
      %s203 = sphi 0, %s187
    $region4: #{tpu_custom_call.1} parent=1 // loop_header_branch
      %21 = sbr.rel (%p19) target = $region8
    $region5: #{tpu_custom_call.1} parent=1 // loop_body
      %s23 = ssub.s32 %s18, 1
      %s24 = ssub.s32 %s18, 2
      %s34 = sadd.s32 1, %s27
      %p35 = scmp.ge.s32.totalorder %s34, 1
      %s36 = scalar_select %p35, 0, %s34
      %s37 = sadd.s32 1, %s26
      %s38 = scalar_select %p35, %s37, %s26
      %p39 = scmp.ge.s32.totalorder %s38, 4
      %s40 = scalar_select %p39, 0, %s38
      %s41 = sadd.s32 1, %s25
      %s42 = scalar_select %p39, %s41, %s25
      %p43 = scmp.ge.s32.totalorder %s42, 1
      %s44 = scalar_select %p43, 0, %s42
      %s45 = ssub.s32 %s25, %s44
      %p46 = scmp.eq.s32.totalorder %s45, 0
      %s48 = sadd.s32 %s47, 1
      %s49 = scalar_select %p46, %s47, %s48
      %p52 = pneg %p46
      %p53 = scmp.eq.s32.totalorder %s18, 3
      %p54 = por %p52, %p53
      %p55 = scmp.ne.s32.totalorder %s47, %s50
      %p56 = scmp.eq.s32.totalorder %s18, 0
      %p57 = por %p55, %p56
      %p58 = scmp.ne.s32.totalorder %s47, %s50
      %p59 = scmp.eq.s32.totalorder %s23, 3
      %p60 = por %p58, %p59
      %p61 = scmp.ne.s32.totalorder %s50, %s51
      %p62 = scmp.eq.s32.totalorder %s23, 0
      %p63 = por %p61, %p62
      %p64 = scmp.ne.s32.totalorder %s50, %s51
      %p65 = scmp.eq.s32.totalorder %s24, 3
      %p66 = por %p64, %p65
      %p68 = scmp.ne.s32.totalorder %s51, %s67
      %p69 = scmp.eq.s32.totalorder %s24, 0
      %p70 = por %p68, %p69
      %s71 = ssub.s32 %s26, %s40
      %s72 = ssub.s32 %s27, %s36
      %s73 = sor.u32 %s71, %s72
      %p74 = scmp.eq.s32.totalorder %s73, 0
      %s76 = sadd.s32 %s75, 1
      %s77 = scalar_select %p74, %s75, %s76
      %p80 = pneg %p74
      %p81 = scmp.eq.s32.totalorder %s18, 3
      %p82 = por %p80, %p81
      %p83 = scmp.ne.s32.totalorder %s75, %s78
      %p84 = scmp.eq.s32.totalorder %s18, 0
      %p85 = por %p83, %p84
      %p86 = scmp.ne.s32.totalorder %s75, %s78
      %p87 = scmp.eq.s32.totalorder %s23, 3
      %p88 = por %p86, %p87
      %p89 = scmp.ne.s32.totalorder %s78, %s79
      %p90 = scmp.eq.s32.totalorder %s23, 0
      %p91 = por %p89, %p90
      %p92 = scmp.ne.s32.totalorder %s78, %s79
      %p93 = scmp.eq.s32.totalorder %s24, 3
      %p94 = por %p92, %p93
      %p96 = scmp.ne.s32.totalorder %s79, %s95
      %p97 = scmp.eq.s32.totalorder %s24, 0
      %p98 = por %p96, %p97
      %s99 = ssub.s32 %s26, %s40
      %s100 = ssub.s32 %s27, %s36
      %s101 = sor.u32 %s99, %s100
      %p102 = scmp.eq.s32.totalorder %s101, 0
      %s104 = sadd.s32 %s103, 1
      %s105 = scalar_select %p102, %s103, %s104
      %p108 = pneg %p102
      %p109 = scmp.eq.s32.totalorder %s18, 3
      %p110 = por %p108, %p109
      %p111 = scmp.ne.s32.totalorder %s103, %s106
      %p112 = scmp.eq.s32.totalorder %s18, 0
      %p113 = por %p111, %p112
      %p114 = scmp.ne.s32.totalorder %s103, %s106
      %p115 = scmp.eq.s32.totalorder %s23, 3
      %p116 = por %p114, %p115
      %p117 = scmp.ne.s32.totalorder %s106, %s107
      %p118 = scmp.eq.s32.totalorder %s23, 0
      %p119 = por %p117, %p118
      %p120 = scmp.ne.s32.totalorder %s106, %s107
      %p121 = scmp.eq.s32.totalorder %s24, 3
      %p122 = por %p120, %p121
      %p124 = scmp.ne.s32.totalorder %s107, %s123
      %p125 = scmp.eq.s32.totalorder %s24, 0
      %p126 = por %p124, %p125
      %s127 = ssub.s32 %s26, %s40
      %s128 = ssub.s32 %s27, %s36
      %s129 = sor.u32 %s127, %s128
      %p130 = scmp.eq.s32.totalorder %s129, 0
      %s132 = sadd.s32 %s131, 1
      %s133 = scalar_select %p130, %s131, %s132
      %p136 = pneg %p130
      %p137 = scmp.eq.s32.totalorder %s18, 3
      %p138 = por %p136, %p137
      %p139 = scmp.ne.s32.totalorder %s131, %s134
      %p140 = scmp.eq.s32.totalorder %s18, 0
      %p141 = por %p139, %p140
      %p142 = scmp.ne.s32.totalorder %s131, %s134
      %p143 = scmp.eq.s32.totalorder %s23, 3
      %p144 = por %p142, %p143
      %p145 = scmp.ne.s32.totalorder %s134, %s135
      %p146 = scmp.eq.s32.totalorder %s23, 0
      %p147 = por %p145, %p146
      %p148 = scmp.ne.s32.totalorder %s134, %s135
      %p149 = scmp.eq.s32.totalorder %s24, 3
      %p150 = por %p148, %p149
      %p152 = scmp.ne.s32.totalorder %s135, %s151
      %p153 = scmp.eq.s32.totalorder %s24, 0
      %p154 = por %p152, %p153
      %s155 = ssub.s32 %s26, %s40
      %p156 = scmp.eq.s32.totalorder %s155, 0
      %s158 = sadd.s32 %s157, 1
      %s159 = scalar_select %p156, %s157, %s158
      %p162 = pneg %p156
      %p163 = scmp.eq.s32.totalorder %s18, 3
      %p164 = por %p162, %p163
      %p165 = scmp.ne.s32.totalorder %s157, %s160
      %p166 = scmp.eq.s32.totalorder %s18, 0
      %p167 = por %p165, %p166
      %p168 = scmp.ne.s32.totalorder %s157, %s160
      %p169 = scmp.eq.s32.totalorder %s23, 3
      %p170 = por %p168, %p169
      %p171 = scmp.ne.s32.totalorder %s160, %s161
      %p172 = scmp.eq.s32.totalorder %s23, 0
      %p173 = por %p171, %p172
      %p174 = scmp.ne.s32.totalorder %s160, %s161
      %p175 = scmp.eq.s32.totalorder %s24, 3
      %p176 = por %p174, %p175
      %p178 = scmp.ne.s32.totalorder %s161, %s177
      %p179 = scmp.eq.s32.totalorder %s24, 0
      %p180 = por %p178, %p179
      %s181 = ssub.s32 %s25, %s44
      %p182 = scmp.eq.s32.totalorder %s181, 0
      %s184 = sadd.s32 %s183, 1
      %s185 = scalar_select %p182, %s183, %s184
      %p188 = pneg %p182
      %p189 = scmp.eq.s32.totalorder %s18, 3
      %p190 = por %p188, %p189
      %p191 = scmp.ne.s32.totalorder %s183, %s186
      %p192 = scmp.eq.s32.totalorder %s18, 0
      %p193 = por %p191, %p192
      %p194 = scmp.ne.s32.totalorder %s183, %s186
      %p195 = scmp.eq.s32.totalorder %s23, 3
      %p196 = por %p194, %p195
      %p197 = scmp.ne.s32.totalorder %s186, %s187
      %p198 = scmp.eq.s32.totalorder %s23, 0
      %p199 = por %p197, %p198
      %p200 = scmp.ne.s32.totalorder %s186, %s187
      %p201 = scmp.eq.s32.totalorder %s24, 3
      %p202 = por %p200, %p201
      %p204 = scmp.ne.s32.totalorder %s187, %s203
      %p205 = scmp.eq.s32.totalorder %s24, 0
      %p206 = por %p204, %p205
      %p207 = scmp.le.s32.totalorder 1, %s18
      %p208 = scmp.lt.s32.totalorder %s18, 5
      %p209 = pnand %p207, %p208
      %p210 = pneg %p209
      // Predicated region
      $region9: #{tpu_custom_call.1} parent=5 // pred_check
        _
      $region10: #{tpu_custom_call.1} parent=5 // pred_check_branch
        %212 = sbr.rel (%p209) target = $region12
      $region11: #{tpu_custom_call.1} parent=5 // pred_region
        %s213 = ssub.s32 %s18, 1
        // Predicated region
        $region13: #{tpu_custom_call.1} parent=11 // pred_check
          %p214 = pneg %p63
        $region14: #{tpu_custom_call.1} parent=11 // pred_check_branch
          %216 = sbr.rel (%p214) target = $region16
        $region15: #{tpu_custom_call.1} parent=11 // pred_region
          %s217 = smul.u32 2, %s28
          %p218 = scmp.lt.s32.totalorder %s217, 1
          %s219 = scalar_select %p218, %s217, 1
          %s220 = smul.addr %s219, 8
          %s221 = scalar_lea.vmem %s0, %s220
          %s222 = smul.u32 2, %s28
        $region16: #{tpu_custom_call.1} parent=11 // pred_fallthru
          _
      $region12: #{tpu_custom_call.1} parent=5 // pred_fallthru
        _
      %p223 = scmp.lt.s32.totalorder %s18, 4
      // Predicated region
      $region17: #{tpu_custom_call.1} parent=5 // pred_check
        %p224 = pneg %p223
      $region18: #{tpu_custom_call.1} parent=5 // pred_check_branch
        %226 = sbr.rel (%p224) target = $region20
      $region19: #{tpu_custom_call.1} parent=5 // pred_region
        // Predicated region
        $region21: #{tpu_custom_call.1} parent=19 // pred_check
          %p227 = pneg %p85
        $region22: #{tpu_custom_call.1} parent=19 // pred_check_branch
          %229 = sbr.rel (%p227) target = $region24
        $region23: #{tpu_custom_call.1} parent=19 // pred_region
          %s230 = sand.u32 %s75, 1
          %s231 = scalar_lea.sflag [#allocation4], %s230
          %s232 = sand.u32 %s75, 1
          %s233 = smul.addr %s232, 128
          %s234 = scalar_lea.vmem [#allocation3], %s233
          %s235 = smul.u32 2, %s27
          %s237 = ssub.s32 2048, 2048
          %238 = vsyncadd %s231, %s237
          %s239 = smul.addr %s26, 32
          %s240 = sadd.s32 %s235, %s239
          %s241 = smul.addr %s240, 64
          %s242 = scalar_lea.hbm %s1, %s241
          %s243 = sshll.u32 %s234, 4
          %s244 = int_to_ptr.vmem [resolvable:$true] %s243
          %249 = dma.hbm_to_vmem [thread:$0]  %s242, 2048, %s244, %s231, 128, 128, 8
        $region24: #{tpu_custom_call.1} parent=19 // pred_fallthru
          _
        // Predicated region
        $region25: #{tpu_custom_call.1} parent=19 // pred_check
          %p250 = pneg %p113
        $region26: #{tpu_custom_call.1} parent=19 // pred_check_branch
          %252 = sbr.rel (%p250) target = $region28
        $region27: #{tpu_custom_call.1} parent=19 // pred_region
          %s253 = smul.u32 2, %s27
          %p254 = scmp.lt.s32.totalorder %s26, 3
          %s255 = scalar_select %p254, %s26, 3
          %p256 = scmp.lt.s32.totalorder %s253, 1
          %s257 = scalar_select %p256, %s253, 1
          %s258 = smul.addr %s255, 2
          %s259 = sadd.s32 %s257, %s258
          %s260 = scalar_lea.vmem %s2, %s259
          %s261 = smul.u32 2, %s27
        $region28: #{tpu_custom_call.1} parent=19 // pred_fallthru
          _
        // Predicated region
        $region29: #{tpu_custom_call.1} parent=19 // pred_check
          %p262 = pneg %p141
        $region30: #{tpu_custom_call.1} parent=19 // pred_check_branch
          %264 = sbr.rel (%p262) target = $region32
        $region31: #{tpu_custom_call.1} parent=19 // pred_region
          %s265 = sand.u32 %s131, 1
          %s266 = scalar_lea.sflag [#allocation7], %s265
          %s267 = sand.u32 %s131, 1
          %s268 = smul.addr %s267, 128
          %s269 = scalar_lea.vmem [#allocation6], %s268
          %s270 = smul.u32 32, %s27
          %s272 = ssub.s32 2048, 2048
          %273 = vsyncadd %s266, %s272
          %s274 = smul.addr %s26, 32
          %s275 = sadd.s32 %s270, %s274
          %s276 = smul.addr %s275, 64
          %s277 = scalar_lea.hbm %s3, %s276
          %s278 = sshll.u32 %s269, 4
          %s279 = int_to_ptr.vmem [resolvable:$true] %s278
          %284 = dma.hbm_to_vmem [thread:$0]  %s277, 2048, %s279, %s266, 64, 64, 4
        $region32: #{tpu_custom_call.1} parent=19 // pred_fallthru
          _
        // Predicated region
        $region33: #{tpu_custom_call.1} parent=19 // pred_check
          %p285 = pneg %p167
        $region34: #{tpu_custom_call.1} parent=19 // pred_check_branch
          %287 = sbr.rel (%p285) target = $region36
        $region35: #{tpu_custom_call.1} parent=19 // pred_region
          %p288 = scmp.lt.s32.totalorder %s26, 3
          %s289 = scalar_select %p288, %s26, 3
          %s290 = smul.addr %s289, 4
          %s291 = scalar_lea.vmem %s4, %s290
        $region36: #{tpu_custom_call.1} parent=19 // pred_fallthru
          _
      $region20: #{tpu_custom_call.1} parent=5 // pred_fallthru
        _
      %p292 = scmp.le.s32.totalorder 1, %s18
      %p293 = scmp.lt.s32.totalorder %s18, 5
      %p294 = pnand %p292, %p293
      %p295 = pneg %p294
      // Predicated region
      $region37: #{tpu_custom_call.1} parent=5 // pred_check
        _
      $region38: #{tpu_custom_call.1} parent=5 // pred_check_branch
        %297 = sbr.rel (%p294) target = $region40
      $region39: #{tpu_custom_call.1} parent=5 // pred_region
        %s298 = ssub.s32 %s18, 1
        %s299 = sand.u32 %s78, 1
        %s300 = scalar_lea.sflag [#allocation4], %s299
        %s301 = sand.u32 %s78, 1
        %s302 = smul.addr %s301, 128
        %s303 = scalar_lea.vmem [#allocation3], %s302
        // Predicated region
        $region41: #{tpu_custom_call.1} parent=39 // pred_check
          %p304 = pneg %p91
        $region42: #{tpu_custom_call.1} parent=39 // pred_check_branch
          %306 = sbr.rel (%p304) target = $region44
        $region43: #{tpu_custom_call.1} parent=39 // pred_region
          %307 = dma.done %s300, 2048
        $region44: #{tpu_custom_call.1} parent=39 // pred_fallthru
          _
        %s308 = sand.u32 %s134, 1
        %s309 = scalar_lea.sflag [#allocation7], %s308
        %s310 = sand.u32 %s134, 1
        %s311 = smul.addr %s310, 128
        %s312 = scalar_lea.vmem [#allocation6], %s311
        // Predicated region
        $region45: #{tpu_custom_call.1} parent=39 // pred_check
          %p313 = pneg %p147
        $region46: #{tpu_custom_call.1} parent=39 // pred_check_branch
          %315 = sbr.rel (%p313) target = $region48
        $region47: #{tpu_custom_call.1} parent=39 // pred_region
          %316 = dma.done %s309, 2048
        $region48: #{tpu_custom_call.1} parent=39 // pred_fallthru
          _
        %s317 = smul.u32 2, %s28
        %p318 = scmp.lt.s32.totalorder %s317, 1
        %s319 = scalar_select %p318, %s317, 1
        %s320 = smul.addr %s319, 8
        %s321 = scalar_lea.vmem %s0, %s320
        %p322 = pneg %p63
        %p323 = pneg %p60
        %s324 = sand.u32 %s78, 1
        %s325 = scalar_lea.sflag [#allocation4], %s324
        %s326 = sand.u32 %s78, 1
        %s327 = smul.addr %s326, 128
        %s328 = scalar_lea.vmem [#allocation3], %s327
        %p329 = pneg %p91
        %p330 = pneg %p88
        %s331 = smul.u32 2, %s30
        %p332 = scmp.lt.s32.totalorder %s29, 3
        %s333 = scalar_select %p332, %s29, 3
        %p334 = scmp.lt.s32.totalorder %s331, 1
        %s335 = scalar_select %p334, %s331, 1
        %s336 = smul.addr %s333, 2
        %s337 = sadd.s32 %s335, %s336
        %s338 = scalar_lea.vmem %s2, %s337
        %p339 = pneg %p119
        %p340 = pneg %p116
        %s341 = sand.u32 %s134, 1
        %s342 = scalar_lea.sflag [#allocation7], %s341
        %s343 = sand.u32 %s134, 1
        %s344 = smul.addr %s343, 128
        %s345 = scalar_lea.vmem [#allocation6], %s344
        %p346 = pneg %p147
        %p347 = pneg %p144
        %p348 = scmp.lt.s32.totalorder %s29, 3
        %s349 = scalar_select %p348, %s29, 3
        %s350 = smul.addr %s349, 4
        %s351 = scalar_lea.vmem %s4, %s350
        %p352 = pneg %p173
        %p353 = pneg %p170
        %p354 = pneg %p199
        %p355 = pneg %p196
        %s356 = smul.u32 2, %s28
        %p357 = scmp.lt.s32.totalorder %s356, 1
        %s358 = scalar_select %p357, %s356, 1
        %s359 = smul.addr %s358, 8
        %s360 = scalar_lea.vmem %s0, %s359
        %s361 = smul.u32 2, %s28
        %s362 = smul.u32 2, %s30
        %s363 = smul.u32 2, %s30
        %p364 = scmp.lt.s32.totalorder %s29, 3
        %s365 = scalar_select %p364, %s29, 3
        %p366 = scmp.lt.s32.totalorder %s363, 1
        %s367 = scalar_select %p366, %s363, 1
        %s368 = smul.addr %s365, 2
        %s369 = sadd.s32 %s367, %s368
        %s370 = scalar_lea.vmem %s2, %s369
        %s371 = smul.u32 2, %s30
        %s372 = smul.u32 32, %s30
        %p373 = scmp.lt.s32.totalorder %s29, 3
        %s374 = scalar_select %p373, %s29, 3
        %s375 = smul.addr %s374, 4
        %s376 = scalar_lea.vmem %s4, %s375
        %s377 = smul.u32 2, %s28
        %p383 = scmp.eq.s32.totalorder %s29, 0
        %p384 = scmp.eq.s32.totalorder %s30, 0
        %p385 = pnand %p383, %p384
        %p386 = pneg %p385
        // Predicated region
        $region49: #{tpu_custom_call.1} parent=39 // pred_check
          _
        $region50: #{tpu_custom_call.1} parent=39 // pred_check_branch
          %388 = sbr.rel (%p385) target = $region52
        $region51: #{tpu_custom_call.1} parent=39 // pred_region
          %v389 = vld [vmem:[%s360] sm:$0xff]
          %v390 = vld [vmem:[%s360 + $0x8] sm:$0xff]
          %391 = vst [vmem:[#allocation8] sm:$0xff] %v389
          %392 = vst [vmem:[#allocation8 + $0x8] sm:$0xff] %v390
        $region52: #{tpu_custom_call.1} parent=39 // pred_fallthru
          _
        // Predicated region
        $region53: #{tpu_custom_call.1} parent=39 // pred_check
          %p393 = pneg %p384
        $region54: #{tpu_custom_call.1} parent=39 // pred_check_branch
          %395 = sbr.rel (%p393) target = $region56
        $region55: #{tpu_custom_call.1} parent=39 // pred_region
          %v396 = vld [vmem:[#allocation8] sm:$0xff]
          %v397 = vld [vmem:[#allocation8 + $0x8] sm:$0xff]
          %398 = vadd.xlane.f32.xlu0 %v396
          %v399 = vpop.xlane.xlu0 %398
          %400 = vadd.xlane.f32.xlu0 %v397
          %v401 = vpop.xlane.xlu0 %400
          %v402 = vrcp.pop 128.0
          %v403 = vmul.f32 %v399, %v402
          %v404 = vmul.f32 %v401, %v402
          %v405 = vmul.f32 %v396, %v396
          %v406 = vmul.f32 %v397, %v397
          %407 = vadd.xlane.f32.xlu0 %v405
          %v408 = vpop.xlane.xlu0 %407
          %409 = vadd.xlane.f32.xlu0 %v406
          %v410 = vpop.xlane.xlu0 %409
          %v411 = vmul.f32 %v408, %v402
          %v412 = vmul.f32 %v410, %v402
          %v413 = vmul.f32 %v403, %v403
          %v414 = vmul.f32 %v404, %v404
          %v415 = vsub.f32 %v411, %v413
          %v416 = vsub.f32 %v412, %v414
          %v417 = vmax.f32 %v415, 0.0
          %v418 = vmax.f32 %v416, 0.0
          %v419 = vsub.f32 %v396, %v403
          %v420 = vsub.f32 %v397, %v404
          %v421 = vadd.f32 %v417, 1e-05
          %v422 = vadd.f32 %v418, 1e-05
          %v423 = vrsqrt.pop %v421
          %v424 = vrsqrt.pop %v422
          %v425 = vmul.f32 %v419, %v423
          %v426 = vmul.f32 %v420, %v424
          %v427 = vld [vmem:[%s376] sm:$0x1]
          %v428 = vlaneseq
          %v429 = vshrl.u32 %v428, 7
          %v430 = vsub.s32 0, %v429
          %v431 = vrot.slane %v427, %v430
          %v432 = vmul.f32 %v425, %v431
          %v433 = vmul.f32 %v426, %v431
          %v434 = vld [vmem:[%s376 + $0x1] sm:$0x1]
          %v435 = vlaneseq
          %v436 = vshrl.u32 %v435, 7
          %v437 = vsub.s32 0, %v436
          %v438 = vrot.slane %v434, %v437
          %v439 = vadd.f32 %v432, %v438
          %v440 = vadd.f32 %v433, %v438
          %v441 = vpack.c.bf16 %v440, %v439
          %442 = vst [vmem:[#allocation2] sm:$0xff] %v441
        $region56: #{tpu_custom_call.1} parent=39 // pred_fallthru
          _
        %v443 = vld [vmem:[#allocation2] sm:$0xff]
        %v444 = vld [vmem:[%s303] sm:$0xff]
        %v445 = vld [vmem:[%s303 + $0x8] sm:$0xff]
        %v446 = vld [vmem:[%s303 + $0x10] sm:$0xff]
        %v447 = vld [vmem:[%s303 + $0x18] sm:$0xff]
        %v448 = vld [vmem:[%s303 + $0x20] sm:$0xff]
        %v449 = vld [vmem:[%s303 + $0x28] sm:$0xff]
        %v450 = vld [vmem:[%s303 + $0x30] sm:$0xff]
        %v451 = vld [vmem:[%s303 + $0x38] sm:$0xff]
        %v452 = vld [vmem:[%s303 + $0x40] sm:$0xff]
        %v453 = vld [vmem:[%s303 + $0x48] sm:$0xff]
        %v454 = vld [vmem:[%s303 + $0x50] sm:$0xff]
        %v455 = vld [vmem:[%s303 + $0x58] sm:$0xff]
        %v456 = vld [vmem:[%s303 + $0x60] sm:$0xff]
        %v457 = vld [vmem:[%s303 + $0x68] sm:$0xff]
        %v458 = vld [vmem:[%s303 + $0x70] sm:$0xff]
        %v459 = vld [vmem:[%s303 + $0x78] sm:$0xff]
        %v476 = vunpack.c.l.b16 %v444
        %v477 = vunpack.c.h.b16 %v444
        %v478 = vunpack.c.l.b16 %v445
        %v479 = vunpack.c.h.b16 %v445
        %v480 = vunpack.c.l.b16 %v446
        %v481 = vunpack.c.h.b16 %v446
        %v482 = vunpack.c.l.b16 %v447
        %v483 = vunpack.c.h.b16 %v447
        %v484 = vunpack.c.l.b16 %v448
        %v485 = vunpack.c.h.b16 %v448
        %v486 = vunpack.c.l.b16 %v449
        %v487 = vunpack.c.h.b16 %v449
        %v488 = vunpack.c.l.b16 %v450
        %v489 = vunpack.c.h.b16 %v450
        %v490 = vunpack.c.l.b16 %v451
        %v491 = vunpack.c.h.b16 %v451
        %v492 = vunpack.c.l.b16 %v452
        %v493 = vunpack.c.h.b16 %v452
        %v494 = vunpack.c.l.b16 %v453
        %v495 = vunpack.c.h.b16 %v453
        %v496 = vunpack.c.l.b16 %v454
        %v497 = vunpack.c.h.b16 %v454
        %v498 = vunpack.c.l.b16 %v455
        %v499 = vunpack.c.h.b16 %v455
        %v500 = vunpack.c.l.b16 %v456
        %v501 = vunpack.c.h.b16 %v456
        %v502 = vunpack.c.l.b16 %v457
        %v503 = vunpack.c.h.b16 %v457
        %v504 = vunpack.c.l.b16 %v458
        %v505 = vunpack.c.h.b16 %v458
        %v506 = vunpack.c.l.b16 %v459
        %v507 = vunpack.c.h.b16 %v459
        %v508 = vpack.c.b16 %v478, %v476
        %v509 = vpack.c.b16 %v479, %v477
        %v510 = vpack.c.b16 %v482, %v480
        %v511 = vpack.c.b16 %v483, %v481
        %v512 = vpack.c.b16 %v486, %v484
        %v513 = vpack.c.b16 %v487, %v485
        %v514 = vpack.c.b16 %v490, %v488
        %v515 = vpack.c.b16 %v491, %v489
        %v516 = vpack.c.b16 %v494, %v492
        %v517 = vpack.c.b16 %v495, %v493
        %v518 = vpack.c.b16 %v498, %v496
        %v519 = vpack.c.b16 %v499, %v497
        %v520 = vpack.c.b16 %v502, %v500
        %v521 = vpack.c.b16 %v503, %v501
        %v522 = vpack.c.b16 %v506, %v504
        %v523 = vpack.c.b16 %v507, %v505
        %540 = vmatprep.subr.bf16.mxu0 %v509
        %541 = vmatpush1.bf16.msra.mxu0 %v508
        %542 = vmatprep.subr.bf16.mxu0 %v511
        %543 = vmatpush1.bf16.msra.mxu0 %v510
        %544 = vmatprep.subr.bf16.mxu0 %v513
        %545 = vmatpush1.bf16.msra.mxu0 %v512
        %546 = vmatprep.subr.bf16.mxu0 %v515
        %547 = vmatpush1.bf16.msra.mxu0 %v514
        %548 = vmatprep.subr.bf16.mxu0 %v517
        %549 = vmatpush1.bf16.msra.mxu0 %v516
        %550 = vmatprep.subr.bf16.mxu0 %v519
        %551 = vmatpush1.bf16.msra.mxu0 %v518
        %552 = vmatprep.subr.bf16.mxu0 %v521
        %553 = vmatpush1.bf16.msra.mxu0 %v520
        %554 = vmatprep.subr.bf16.mxu0 %v523
        %555 = vmatpush1.bf16.msra.mxu0 %v522
        %556 = vmatprep.subr.bf16.mxu0 0
        %557 = vmatpush1.bf16.msra.mxu0 0
        %558 = vmatprep.subr.bf16.mxu0 0
        %559 = vmatpush1.bf16.msra.mxu0 0
        %560 = vmatprep.subr.bf16.mxu0 0
        %561 = vmatpush1.bf16.msra.mxu0 0
        %562 = vmatprep.subr.bf16.mxu0 0
        %563 = vmatpush1.bf16.msra.mxu0 0
        %564 = vmatprep.subr.bf16.mxu0 0
        %565 = vmatpush1.bf16.msra.mxu0 0
        %566 = vmatprep.subr.bf16.mxu0 0
        %567 = vmatpush1.bf16.msra.mxu0 0
        %568 = vmatprep.subr.bf16.mxu0 0
        %569 = vmatpush1.bf16.msra.mxu0 0
        %570 = vmatprep.subr.bf16.mxu0 0
        %571 = vmatpush1.bf16.msra.mxu0 0
        %572 = vmatprep.mubr.bf16.mxu0 0
        %573 = vmatmul.mubr.bf16.gmra.mrb[0].mxu0 %v443
        %v574 = vpop.f32.mrb[0].mxu0
        %v575 = vadd.f32 0.0, %v574
        %v576 = vpop.f32.mrb[0].mxu0
        %v577 = vadd.f32 0.0, %v576
        %v578 = vpop.f32.mrb[0].mxu0
        %v579 = vadd.f32 0.0, %v578
        %v580 = vpop.f32.mrb[0].mxu0
        %v581 = vadd.f32 0.0, %v580
        %582 = vdwg.mxu0
        %v583 = vpack.c.bf16 %v579, %v575
        %v584 = vpack.c.bf16 %v581, %v577
        %v585 = vld [vmem:[%s370] sm:$0x3]
        %v587 = vlaneseq
        %v588 = vshrl.u32 %v587, 7
        %v589 = vsub.s32 0, %v588
        %v590 = vrot.slane %v585, %v589
        %v591 = vlaneseq
        %v592 = vshrl.u32 %v591, 7
        %v593 = vsub.s32 1, %v592
        %v594 = vrot.slane %v585, %v593
        %v597 = vpack.c.bf16 %v590, %v590
        %v598 = vpack.c.bf16 %v594, %v594
        %v600 = vpack.i.b16 %v597, %v597
        %v602 = vlaneseq
        %v603 = vshrl.u32 %v602, 7
        %v604 = vsub.s32 0, %v603
        %v605 = vrot.slane %v600, %v604
        %v607 = vpack.i.b16 %v598, %v598
        %v609 = vlaneseq
        %v610 = vshrl.u32 %v609, 7
        %v611 = vsub.s32 0, %v610
        %v612 = vrot.slane %v607, %v611
        %v613 = vadd.bf16 %v583, %v605
        %v614 = vadd.bf16 %v584, %v612
        %v615 = vmul.bf16 %v613, %v613
        %v616 = vmul.bf16 %v614, %v614
        %v617 = vmul.bf16 %v613, %v615
        %v618 = vmul.bf16 %v614, %v616
        %v619 = vmul.bf16 %v617, 1027030327
        %v620 = vmul.bf16 %v618, 1027030327
        %v621 = vadd.bf16 %v613, %v619
        %v622 = vadd.bf16 %v614, %v620
        %v623 = vmul.bf16 %v621, 1061961548
        %v624 = vmul.bf16 %v622, 1061961548
        %v625 = vtanh.bf16.pop %v623
        %v626 = vtanh.bf16.pop %v624
        %v627 = vadd.bf16 %v625, 1065369472
        %v628 = vadd.bf16 %v626, 1065369472
        %v629 = vmul.bf16 %v627, 1056980736
        %v630 = vmul.bf16 %v628, 1056980736
        %v631 = vmul.bf16 %v613, %v629
        %v632 = vmul.bf16 %v614, %v630
        %v633 = vld [vmem:[%s312] sm:$0xf]
        %v634 = vld [vmem:[%s312 + $0x4] sm:$0xf]
        %v635 = vld [vmem:[%s312 + $0x8] sm:$0xf]
        %v636 = vld [vmem:[%s312 + $0xc] sm:$0xf]
        %v637 = vld [vmem:[%s312 + $0x10] sm:$0xf]
        %v638 = vld [vmem:[%s312 + $0x14] sm:$0xf]
        %v639 = vld [vmem:[%s312 + $0x18] sm:$0xf]
        %v640 = vld [vmem:[%s312 + $0x1c] sm:$0xf]
        %v641 = vld [vmem:[%s312 + $0x20] sm:$0xf]
        %v642 = vld [vmem:[%s312 + $0x24] sm:$0xf]
        %v643 = vld [vmem:[%s312 + $0x28] sm:$0xf]
        %v644 = vld [vmem:[%s312 + $0x2c] sm:$0xf]
        %v645 = vld [vmem:[%s312 + $0x30] sm:$0xf]
        %v646 = vld [vmem:[%s312 + $0x34] sm:$0xf]
        %v647 = vld [vmem:[%s312 + $0x38] sm:$0xf]
        %v648 = vld [vmem:[%s312 + $0x3c] sm:$0xf]
        %v649 = vld [vmem:[%s312 + $0x40] sm:$0xf]
        %v650 = vld [vmem:[%s312 + $0x44] sm:$0xf]
        %v651 = vld [vmem:[%s312 + $0x48] sm:$0xf]
        %v652 = vld [vmem:[%s312 + $0x4c] sm:$0xf]
        %v653 = vld [vmem:[%s312 + $0x50] sm:$0xf]
        %v654 = vld [vmem:[%s312 + $0x54] sm:$0xf]
        %v655 = vld [vmem:[%s312 + $0x58] sm:$0xf]
        %v656 = vld [vmem:[%s312 + $0x5c] sm:$0xf]
        %v657 = vld [vmem:[%s312 + $0x60] sm:$0xf]
        %v658 = vld [vmem:[%s312 + $0x64] sm:$0xf]
        %v659 = vld [vmem:[%s312 + $0x68] sm:$0xf]
        %v660 = vld [vmem:[%s312 + $0x6c] sm:$0xf]
        %v661 = vld [vmem:[%s312 + $0x70] sm:$0xf]
        %v662 = vld [vmem:[%s312 + $0x74] sm:$0xf]
        %v663 = vld [vmem:[%s312 + $0x78] sm:$0xf]
        %v664 = vld [vmem:[%s312 + $0x7c] sm:$0xf]
        %v665 = vld [vmem:[%s376 + $0x2] sm:$0x1]
        %s666 = scalar_select %p384, 1, 0
        %v667 = vstv %s666
        %vm668 = vcmp.eq.s32.totalorder %v667, 1
        %v669 = vsel %vm668, %v665, 0.0
        %v670 = vlaneseq
        %v671 = vshrl.u32 %v670, 7
        %v672 = vsub.s32 0, %v671
        %v673 = vrot.slane %v669, %v672
        %v706 = vunpack.c.l.b16 %v633
        %v707 = vunpack.c.l.b16 %v634
        %v708 = vunpack.c.l.b16 %v635
        %v709 = vunpack.c.l.b16 %v636
        %v710 = vunpack.c.l.b16 %v637
        %v711 = vunpack.c.l.b16 %v638
        %v712 = vunpack.c.l.b16 %v639
        %v713 = vunpack.c.l.b16 %v640
        %v714 = vunpack.c.l.b16 %v641
        %v715 = vunpack.c.l.b16 %v642
        %v716 = vunpack.c.l.b16 %v643
        %v717 = vunpack.c.l.b16 %v644
        %v718 = vunpack.c.l.b16 %v645
        %v719 = vunpack.c.l.b16 %v646
        %v720 = vunpack.c.l.b16 %v647
        %v721 = vunpack.c.l.b16 %v648
        %v722 = vunpack.c.l.b16 %v649
        %v723 = vunpack.c.l.b16 %v650
        %v724 = vunpack.c.l.b16 %v651
        %v725 = vunpack.c.l.b16 %v652
        %v726 = vunpack.c.l.b16 %v653
        %v727 = vunpack.c.l.b16 %v654
        %v728 = vunpack.c.l.b16 %v655
        %v729 = vunpack.c.l.b16 %v656
        %v730 = vunpack.c.l.b16 %v657
        %v731 = vunpack.c.l.b16 %v658
        %v732 = vunpack.c.l.b16 %v659
        %v733 = vunpack.c.l.b16 %v660
        %v734 = vunpack.c.l.b16 %v661
        %v735 = vunpack.c.l.b16 %v662
        %v736 = vunpack.c.l.b16 %v663
        %v737 = vunpack.c.l.b16 %v664
        %v738 = vpack.c.b16 %v707, %v706
        %v739 = vpack.c.b16 %v709, %v708
        %v740 = vpack.c.b16 %v711, %v710
        %v741 = vpack.c.b16 %v713, %v712
        %v742 = vpack.c.b16 %v715, %v714
        %v743 = vpack.c.b16 %v717, %v716
        %v744 = vpack.c.b16 %v719, %v718
        %v745 = vpack.c.b16 %v721, %v720
        %v746 = vpack.c.b16 %v723, %v722
        %v747 = vpack.c.b16 %v725, %v724
        %v748 = vpack.c.b16 %v727, %v726
        %v749 = vpack.c.b16 %v729, %v728
        %v750 = vpack.c.b16 %v731, %v730
        %v751 = vpack.c.b16 %v733, %v732
        %v752 = vpack.c.b16 %v735, %v734
        %v753 = vpack.c.b16 %v737, %v736
        %770 = vmatprep.subr.bf16.mxu0 0
        %771 = vmatpush1.bf16.msra.mxu0 %v738
        %772 = vmatprep.subr.bf16.mxu0 0
        %773 = vmatpush1.bf16.msra.mxu0 %v739
        %774 = vmatprep.subr.bf16.mxu0 0
        %775 = vmatpush1.bf16.msra.mxu0 %v740
        %776 = vmatprep.subr.bf16.mxu0 0
        %777 = vmatpush1.bf16.msra.mxu0 %v741
        %778 = vmatprep.subr.bf16.mxu0 0
        %779 = vmatpush1.bf16.msra.mxu0 %v742
        %780 = vmatprep.subr.bf16.mxu0 0
        %781 = vmatpush1.bf16.msra.mxu0 %v743
        %782 = vmatprep.subr.bf16.mxu0 0
        %783 = vmatpush1.bf16.msra.mxu0 %v744
        %784 = vmatprep.subr.bf16.mxu0 0
        %785 = vmatpush1.bf16.msra.mxu0 %v745
        %786 = vmatprep.subr.bf16.mxu0 0
        %787 = vmatpush1.bf16.msra.mxu0 %v746
        %788 = vmatprep.subr.bf16.mxu0 0
        %789 = vmatpush1.bf16.msra.mxu0 %v747
        %790 = vmatprep.subr.bf16.mxu0 0
        %791 = vmatpush1.bf16.msra.mxu0 %v748
        %792 = vmatprep.subr.bf16.mxu0 0
        %793 = vmatpush1.bf16.msra.mxu0 %v749
        %794 = vmatprep.subr.bf16.mxu0 0
        %795 = vmatpush1.bf16.msra.mxu0 %v750
        %796 = vmatprep.subr.bf16.mxu0 0
        %797 = vmatpush1.bf16.msra.mxu0 %v751
        %798 = vmatprep.subr.bf16.mxu0 0
        %799 = vmatpush1.bf16.msra.mxu0 %v752
        %800 = vmatprep.subr.bf16.mxu0 0
        %801 = vmatpush1.bf16.msra.mxu0 %v753
        %802 = vmatprep.mubr.bf16.mxu0 %v632
        %803 = vmatmul.mubr.bf16.gmra.mrb[0].mxu0 %v631
        %v804 = vpop.f32.mrb[0].mxu0
        %v805 = vadd.f32 %v673, %v804
        %v806 = vpop.f32.mrb[0].mxu0
        %v807 = vpop.f32.mrb[0].mxu0
        %v808 = vadd.f32 %v673, %v807
        %v809 = vpop.f32.mrb[0].mxu0
        %810 = vdwg.mxu0
        %v811 = vld [vmem:[#allocation8] sm:$0xff]
        %v812 = vld [vmem:[#allocation8 + $0x8] sm:$0xff]
        %v813 = vadd.f32 %v811, %v805
        %v814 = vadd.f32 %v812, %v808
        %815 = vst [vmem:[#allocation8] sm:$0xff] %v813
        %816 = vst [vmem:[#allocation8 + $0x8] sm:$0xff] %v814
        // Predicated region
        $region57: #{tpu_custom_call.1} parent=39 // pred_check
          %p817 = pneg %p196
        $region58: #{tpu_custom_call.1} parent=39 // pred_check_branch
          %819 = sbr.rel (%p817) target = $region60
        $region59: #{tpu_custom_call.1} parent=39 // pred_region
          %s820 = smul.u32 2, %s28
          %s822 = ssub.s32 256, 256
          %823 = vsyncadd [#allocation5], %s822
          %s824 = smul.addr %s820, 128
          %s825 = scalar_lea.hbm %s5, %s824
          %s826 = sshll.u32 [#allocation8], 4
          %s827 = int_to_ptr.vmem [resolvable:$true] %s826
          %832 = dma.vmem_to_hbm [thread:$0]  %s827, 256, %s825, [#allocation5], 128, 128, 8
        $region60: #{tpu_custom_call.1} parent=39 // pred_fallthru
          _
        // Predicated region
        $region61: #{tpu_custom_call.1} parent=39 // pred_check
          %p833 = pneg %p196
        $region62: #{tpu_custom_call.1} parent=39 // pred_check_branch
          %835 = sbr.rel (%p833) target = $region64
        $region63: #{tpu_custom_call.1} parent=39 // pred_region
          %836 = dma.done [#allocation5], 256
        $region64: #{tpu_custom_call.1} parent=39 // pred_fallthru
          _
      $region40: #{tpu_custom_call.1} parent=5 // pred_fallthru
        _
      %p837 = scmp.le.s32.totalorder 2, %s18
      // Predicated region
      $region65: #{tpu_custom_call.1} parent=5 // pred_check
        %p838 = pneg %p837
      $region66: #{tpu_custom_call.1} parent=5 // pred_check_branch
        %840 = sbr.rel (%p838) target = $region68
      $region67: #{tpu_custom_call.1} parent=5 // pred_region
        %s841 = ssub.s32 %s18, 2
      $region68: #{tpu_custom_call.1} parent=5 // pred_fallthru
        _
    $region6: #{tpu_custom_call.1} parent=1 // loop_footer
      %s22 = sadd.s32 1, %s18
    $region7: #{tpu_custom_call.1} parent=1 // loop_footer_branch
      %17 = sbr.rel target = $region3
    $region8: #{tpu_custom_call.1} parent=1 // loop_exit
      _
    %842 = vsyncpa [#allocation4], 1
    %s843 = scalar_lea.sflag [#allocation4], 1
    %844 = vsyncpa %s843, 1
    %845 = vsyncpa [#allocation7], 1
    %s846 = scalar_lea.sflag [#allocation7], 1
    %847 = vsyncpa %s846, 1
    %848 = vsyncpa [#allocation5], 1
    %s849 = scalar_lea.sflag [#allocation5], 1
    %850 = vsyncpa %s849, 1

</llo_original>
